<compile_context>
chip_gen: v5e
topology: v5e:2x2
jax: 0.10.0
libtpu: 0.0.40
codegen_flags: <defaults>
</compile_context>

<pallas_src>
import functools

import jax
import jax.numpy as jnp
from jax.experimental import pallas as pl
from jax.experimental.pallas import tpu as pltpu


def _round_up(n: int, m: int) -> int:
    return ((n + m - 1) // m) * m


def _mlp_kernel(x_ref, *refs, num_layers: int):
    """Fused MLP on one row-tile: y = W_L(...relu(W_1 x + b_1)...) + b_L."""
    out_ref = refs[-1]
    h = x_ref[...]                                   # (tm, num_feat) f32
    for li in range(num_layers):
        w_ref = refs[2 * li]                         # (din, dout) bf16, VMEM-resident
        b_ref = refs[2 * li + 1]                     # (1,  dout)  f32
        h = jnp.dot(h.astype(jnp.bfloat16), w_ref[...],
                    preferred_element_type=jnp.float32)   # MXU bf16 x bf16 -> f32 acc
        h = h + b_ref[...]                           # bias broadcast over rows (f32)
        if li < num_layers - 1:                      # no activation on final layer
            h = jnp.maximum(h, 0.0)
    out_ref[...] = h.astype(out_ref.dtype)           # (tm, num_class) f32


def mlp_forward_pallas(x, prepared_params, num_class, *, block_rows: int = 8192):
    """Run the whole MLP as ONE Pallas kernel, tiled over rows of x.

    x: (N, num_feat) f32; prepared_params: list of (w:(din,dout) bf16, b:(1,dout) f32).
    Returns (N, num_class) f32 logits.
    """
    n, num_feat = x.shape
    num_layers = len(prepared_params)

    # Row tiling: multiple of 8 (sublane), >=2 grid steps when possible (v7x
    # megacore), capped by block_rows; pad N so the tile divides exactly.
    half = -(-n // 2)                                # cdiv(n, 2)
    tm = max(8, _round_up(min(block_rows, half), 8))
    n_pad = _round_up(n, tm)
    if n_pad != n:
        x = jnp.pad(x, ((0, n_pad - n), (0, 0)))     # junk rows, sliced off below

    in_specs = [pl.BlockSpec((tm, num_feat), lambda i: (i, 0))]
    flat_wb = []
    for (w, b) in prepared_params:
        in_specs.append(pl.BlockSpec(w.shape, lambda i: (0, 0)))   # resident
        in_specs.append(pl.BlockSpec(b.shape, lambda i: (0, 0)))   # resident
        flat_wb.append(w)
        flat_wb.append(b)

    kernel = functools.partial(_mlp_kernel, num_layers=num_layers)
    out = pl.pallas_call(
        kernel,
        out_shape=jax.ShapeDtypeStruct((n_pad, num_class), jnp.float32),
        grid_spec=pltpu.PrefetchScalarGridSpec(
            num_scalar_prefetch=0,
            grid=(n_pad // tm,),
            in_specs=in_specs,
            # Block last dim == full array last dim -> legal narrow block; HBM
            # writeback is contiguous and 16x smaller than a 128-padded slab.
            out_specs=pl.BlockSpec((tm, num_class), lambda i: (i, 0)),
        ),
        compiler_params=pltpu.CompilerParams(
            dimension_semantics=("parallel",),        # shard row tiles across TCs (v7x)
            vmem_limit_bytes=48 * 1024 * 1024,        # lift v5e's 16 MiB scoped default
        ),
    )(x, *flat_wb)
    return out[:n] if n_pad != n else out


def init_mlp_params(key, hidden_dimensions):
    """Deterministic f32 Linear-layer params for dims [num_feat, ..., num_class]."""
    params = []
    for i in range(len(hidden_dimensions) - 1):
        din, dout = hidden_dimensions[i], hidden_dimensions[i + 1]
        key, kw, kb = jax.random.split(key, 3)
        scale = 1.0 / jnp.sqrt(jnp.float32(din))
        w = jax.random.uniform(kw, (din, dout), jnp.float32, -scale, scale)
        b = jax.random.uniform(kb, (1, dout), jnp.float32, -scale, scale)
        params.append((w, b))
    return params


def prepare_params(params_f32):
    """One-time prep, hoisted out of the forward path: weights -> bf16 for the MXU."""
    return [(w.astype(jnp.bfloat16), b) for (w, b) in params_f32]


def student_forward(x, prepared_params, num_class):
    """Equivalent of student.forward(data): returns (hidden, None, None)."""
    hidden = mlp_forward_pallas(x, prepared_params, num_class)
    return hidden, None, None


if __name__ == "__main__":
    # Small synthetic config: 24 nodes, num_feat=32, two hidden layers of 32,
    # num_class=8 (exercises row padding AND a 2-step grid).
    num_nodes = 24
    num_feat = 32
    hidden_dims = [32, 32]
    num_class = 8
    hidden_dimensions = [num_feat] + hidden_dims + [num_class]

    key = jax.random.PRNGKey(0)
    key, kx = jax.random.split(key)
    x = jax.random.normal(kx, (num_nodes, num_feat), jnp.float32)
    params = init_mlp_params(key, hidden_dimensions)
    prepared = prepare_params(params)

    hidden, _, _ = student_forward(x, prepared, num_class)
    hidden = jax.block_until_ready(hidden)
    assert hidden.shape == (num_nodes, num_class)
    assert hidden.dtype == jnp.float32

    # Pure-JAX reference with the same bf16-operand / f32-accumulate math.
    h_ref = x
    for li, (w, b) in enumerate(params):
        h_ref = jnp.dot(h_ref.astype(jnp.bfloat16), w.astype(jnp.bfloat16),
                        preferred_element_type=jnp.float32) + b
        if li < len(params) - 1:
            h_ref = jnp.maximum(h_ref, 0.0)
    assert jnp.allclose(hidden, h_ref, atol=1e-2, rtol=1e-2)

    print("KERNEL_OK")
</pallas_src>

<mosaic_0001>
module attributes {stable_mosaic.version = 11 : i64} {
  func.func @_mlp_kernel(%arg0: i32, %arg1: memref<16x32xf32, #tpu.memory_space<vmem>>, %arg2: memref<32x32xbf16, #tpu.memory_space<vmem>>, %arg3: memref<1x32xf32, #tpu.memory_space<vmem>>, %arg4: memref<32x32xbf16, #tpu.memory_space<vmem>>, %arg5: memref<1x32xf32, #tpu.memory_space<vmem>>, %arg6: memref<32x8xbf16, #tpu.memory_space<vmem>>, %arg7: memref<1x8xf32, #tpu.memory_space<vmem>>, %arg8: memref<16x8xf32, #tpu.memory_space<vmem>>) attributes {dimension_semantics = [#tpu.dimension_semantics<parallel>], iteration_bounds = array<i64: 2>, scalar_prefetch = 0 : i64, scratch_operands = 0 : i64, tpu.core_type = #tpu.core_type<tc>, window_params = [{transform_indices = @transform_0, window_bounds = array<i64: 16, 32>}, {pipeline_mode = #tpu.pipeline_mode<synchronous>, transform_indices = @transform_1, window_bounds = array<i64: 32, 32>}, {pipeline_mode = #tpu.pipeline_mode<synchronous>, transform_indices = @transform_2, window_bounds = array<i64: 1, 32>}, {pipeline_mode = #tpu.pipeline_mode<synchronous>, transform_indices = @transform_3, window_bounds = array<i64: 32, 32>}, {pipeline_mode = #tpu.pipeline_mode<synchronous>, transform_indices = @transform_4, window_bounds = array<i64: 1, 32>}, {pipeline_mode = #tpu.pipeline_mode<synchronous>, transform_indices = @transform_5, window_bounds = array<i64: 32, 8>}, {pipeline_mode = #tpu.pipeline_mode<synchronous>, transform_indices = @transform_6, window_bounds = array<i64: 1, 8>}, {transform_indices = @transform_7, window_bounds = array<i64: 16, 8>}]} {
    %c0 = arith.constant 0 : index
    %c0_0 = arith.constant 0 : index
    %0 = vector.load %arg1[%c0, %c0_0] : memref<16x32xf32, #tpu.memory_space<vmem>>, vector<16x32xf32>
    %1 = arith.truncf %0 : vector<16x32xf32> to vector<16x32xbf16>
    %c0_1 = arith.constant 0 : index
    %c0_2 = arith.constant 0 : index
    %2 = vector.load %arg2[%c0_1, %c0_2] : memref<32x32xbf16, #tpu.memory_space<vmem>>, vector<32x32xbf16>
    %cst = arith.constant dense<0.000000e+00> : vector<16x32xf32>
    %3 = tpu.matmul %1, %2, %cst {dimension_numbers = #tpu.dot_dimension_numbers<[1], [0], [0], [1], [0, 0, 1, 1], [], []>} : vector<16x32xbf16>, vector<32x32xbf16>, vector<16x32xf32> -> vector<16x32xf32>
    %c0_3 = arith.constant 0 : index
    %c0_4 = arith.constant 0 : index
    %4 = vector.load %arg3[%c0_3, %c0_4] : memref<1x32xf32, #tpu.memory_space<vmem>>, vector<1x32xf32>
    %5 = vector.broadcast %4 : vector<1x32xf32> to vector<16x32xf32>
    %6 = arith.addf %3, %5 : vector<16x32xf32>
    %cst_5 = arith.constant 0.000000e+00 : f32
    %7 = vector.broadcast %cst_5 : f32 to vector<16x32xf32>
    %8 = arith.maximumf %6, %7 : vector<16x32xf32>
    %9 = arith.truncf %8 : vector<16x32xf32> to vector<16x32xbf16>
    %c0_6 = arith.constant 0 : index
    %c0_7 = arith.constant 0 : index
    %10 = vector.load %arg4[%c0_6, %c0_7] : memref<32x32xbf16, #tpu.memory_space<vmem>>, vector<32x32xbf16>
    %cst_8 = arith.constant dense<0.000000e+00> : vector<16x32xf32>
    %11 = tpu.matmul %9, %10, %cst_8 {dimension_numbers = #tpu.dot_dimension_numbers<[1], [0], [0], [1], [0, 0, 1, 1], [], []>} : vector<16x32xbf16>, vector<32x32xbf16>, vector<16x32xf32> -> vector<16x32xf32>
    %c0_9 = arith.constant 0 : index
    %c0_10 = arith.constant 0 : index
    %12 = vector.load %arg5[%c0_9, %c0_10] : memref<1x32xf32, #tpu.memory_space<vmem>>, vector<1x32xf32>
    %13 = vector.broadcast %12 : vector<1x32xf32> to vector<16x32xf32>
    %14 = arith.addf %11, %13 : vector<16x32xf32>
    %cst_11 = arith.constant 0.000000e+00 : f32
    %15 = vector.broadcast %cst_11 : f32 to vector<16x32xf32>
    %16 = arith.maximumf %14, %15 : vector<16x32xf32>
    %17 = arith.truncf %16 : vector<16x32xf32> to vector<16x32xbf16>
    %c0_12 = arith.constant 0 : index
    %c0_13 = arith.constant 0 : index
    %18 = vector.load %arg6[%c0_12, %c0_13] : memref<32x8xbf16, #tpu.memory_space<vmem>>, vector<32x8xbf16>
    %cst_14 = arith.constant dense<0.000000e+00> : vector<16x8xf32>
    %19 = tpu.matmul %17, %18, %cst_14 {dimension_numbers = #tpu.dot_dimension_numbers<[1], [0], [0], [1], [0, 0, 1, 1], [], []>} : vector<16x32xbf16>, vector<32x8xbf16>, vector<16x8xf32> -> vector<16x8xf32>
    %c0_15 = arith.constant 0 : index
    %c0_16 = arith.constant 0 : index
    %20 = vector.load %arg7[%c0_15, %c0_16] : memref<1x8xf32, #tpu.memory_space<vmem>>, vector<1x8xf32>
    %21 = vector.broadcast %20 : vector<1x8xf32> to vector<16x8xf32>
    %22 = arith.addf %19, %21 : vector<16x8xf32>
    %c0_17 = arith.constant 0 : index
    %c0_18 = arith.constant 0 : index
    %23 = vector.load %arg8[%c0_17, %c0_18] : memref<16x8xf32, #tpu.memory_space<vmem>>, vector<16x8xf32>
    tpu.vector_store %arg8[%c0_17, %c0_18], %22 {strides = array<i32>} : memref<16x8xf32, #tpu.memory_space<vmem>>, vector<16x8xf32>,
    return
  }
  func.func @transform_0(%arg0: i32) -> (i32, i32) {
    %c0_i32 = arith.constant 0 : i32
    %c0_i32_0 = arith.constant 0 : i32
    return %arg0, %c0_i32 : i32, i32
  }
  func.func @transform_1(%arg0: i32) -> (i32, i32) {
    %c0_i32 = arith.constant 0 : i32
    %c0_i32_0 = arith.constant 0 : i32
    %c0_i32_1 = arith.constant 0 : i32
    return %c0_i32, %c0_i32_0 : i32, i32
  }
  func.func @transform_2(%arg0: i32) -> (i32, i32) {
    %c0_i32 = arith.constant 0 : i32
    %c0_i32_0 = arith.constant 0 : i32
    %c0_i32_1 = arith.constant 0 : i32
    return %c0_i32, %c0_i32_0 : i32, i32
  }
  func.func @transform_3(%arg0: i32) -> (i32, i32) {
    %c0_i32 = arith.constant 0 : i32
    %c0_i32_0 = arith.constant 0 : i32
    %c0_i32_1 = arith.constant 0 : i32
    return %c0_i32, %c0_i32_0 : i32, i32
  }
  func.func @transform_4(%arg0: i32) -> (i32, i32) {
    %c0_i32 = arith.constant 0 : i32
    %c0_i32_0 = arith.constant 0 : i32
    %c0_i32_1 = arith.constant 0 : i32
    return %c0_i32, %c0_i32_0 : i32, i32
  }
  func.func @transform_5(%arg0: i32) -> (i32, i32) {
    %c0_i32 = arith.constant 0 : i32
    %c0_i32_0 = arith.constant 0 : i32
    %c0_i32_1 = arith.constant 0 : i32
    return %c0_i32, %c0_i32_0 : i32, i32
  }
  func.func @transform_6(%arg0: i32) -> (i32, i32) {
    %c0_i32 = arith.constant 0 : i32
    %c0_i32_0 = arith.constant 0 : i32
    %c0_i32_1 = arith.constant 0 : i32
    return %c0_i32, %c0_i32_0 : i32, i32
  }
  func.func @transform_7(%arg0: i32) -> (i32, i32) {
    %c0_i32 = arith.constant 0 : i32
    %c0_i32_0 = arith.constant 0 : i32
    return %arg0, %c0_i32 : i32, i32
  }
}

</mosaic_0001>

<llo_original>
// kernel: tpu_custom_call.1
$region0: #{tpu_custom_call.1}
  #allocation0 [shape = 'u32[]', space=smem, size = 0x4, offset = 0x4, fixed_abs, tag = 'smem constant byte address 0x4 - core index']
  #allocation1 [shape = 'u32[72,128]{1,0:T(1,128)}', space=vmem, size = 0x9000, scoped, tag = 'internal scratch']
  %s0 = inlined_call_operand.hbm [shape: f32[32,32], index: 0, kind: input, shape index: {}]
  %s1 = inlined_call_operand.vmem [shape: bf16[32,32], index: 1, kind: input, shape index: {}]
  %s2 = inlined_call_operand.vmem [shape: f32[1,32], index: 2, kind: input, shape index: {}]
  %s3 = inlined_call_operand.hbm [shape: bf16[32,32], index: 3, kind: input, shape index: {}]
  %s4 = inlined_call_operand.vmem [shape: f32[1,32], index: 4, kind: input, shape index: {}]
  %s5 = inlined_call_operand.vmem [shape: bf16[32,8], index: 5, kind: input, shape index: {}]
  %s6 = inlined_call_operand.vmem [shape: f32[1,8], index: 6, kind: input, shape index: {}]
  %s7 = inlined_call_operand.vmem [shape: f32[32,8], index: 7, kind: output, shape index: {}]
  %s8 = sld [smem:[#allocation0]]
  $region69: #{tpu_custom_call.1} parent=0
    _
  %s10 = ssub.s32 1, %s8
  %s11 = scalar_select 0, %s10, %s8
  $region1: #{tpu_custom_call.1} parent=0
    #allocation2 [shape = 'u8[16384]{0}', space=vmem, size = 0x4000, scoped, tag = 'input window, operand 0']
    #allocation3 [shape = 's32[2]{0}', space=sflag, size = 0x8, scoped, tag = 'scoped memory for tpu_custom_call.1']
    #allocation4 [shape = 'u8[8192]{0}', space=vmem, size = 0x2000, scoped, tag = 'input window, operand 3, single buffered']
    #allocation5 [shape = 's32[1]{0}', space=sflag, size = 0x4, scoped, tag = 'scoped memory for tpu_custom_call.1']
    %12 = vsyncpa [#allocation3], 0
    %s13 = scalar_lea.sflag [#allocation3], 1
    %14 = vsyncpa %s13, 0
    %15 = vsyncpa [#allocation5], 0
    loop: start=0, step=1, limit=4
    $region2: #{tpu_custom_call.1} parent=1 // loop_pre_header
      _
    $region3: #{tpu_custom_call.1} parent=1 // loop_header
      %s17 = sphi 0, %s21
      %p18 = scmp.ge.s32.totalorder %s17, 4
      %s27 = sphi 0, %s29
      %s30 = sphi 0, %s27
      %s31 = sphi 0, %s30
      %s47 = sphi 0, %s31
      %s51 = sphi 0, %s51
      %s53 = sphi 0, %s51
      %s54 = sphi 0, %s53
      %s68 = sphi 0, %s54
      %s72 = sphi 0, %s72
      %s74 = sphi 0, %s72
      %s75 = sphi 0, %s74
      %s89 = sphi 0, %s75
      %s93 = sphi 0, %s93
      %s95 = sphi 0, %s93
      %s96 = sphi 0, %s95
      %s110 = sphi 0, %s96
      %s114 = sphi 0, %s114
      %s116 = sphi 0, %s114
      %s117 = sphi 0, %s116
      %s131 = sphi 0, %s117
      %s135 = sphi 0, %s135
      %s137 = sphi 0, %s135
      %s138 = sphi 0, %s137
      %s152 = sphi 0, %s138
      %s156 = sphi 0, %s156
      %s158 = sphi 0, %s156
      %s159 = sphi 0, %s158
      %s173 = sphi 0, %s159
      %s179 = sphi 0, %s181
      %s182 = sphi 0, %s179
      %s183 = sphi 0, %s182
      %s199 = sphi 0, %s183
    $region4: #{tpu_custom_call.1} parent=1 // loop_header_branch
      %20 = sbr.rel (%p18) target = $region8
    $region5: #{tpu_custom_call.1} parent=1 // loop_body
      %s22 = ssub.s32 %s17, 1
      %s23 = ssub.s32 %s17, 2
      %s24 = sadd.s32 %s17, 1
      %s25 = ssub.s32 %s17, %s24
      %p26 = scmp.eq.s32.totalorder %s25, 0
      %s28 = sadd.s32 %s27, 1
      %s29 = scalar_select %p26, %s27, %s28
      %p32 = pneg %p26
      %p33 = scmp.eq.s32.totalorder %s17, 1
      %p34 = por %p32, %p33
      %p35 = scmp.ne.s32.totalorder %s27, %s30
      %p36 = scmp.eq.s32.totalorder %s17, 0
      %p37 = por %p35, %p36
      %p38 = scmp.ne.s32.totalorder %s27, %s30
      %p39 = scmp.eq.s32.totalorder %s22, 1
      %p40 = por %p38, %p39
      %p41 = scmp.ne.s32.totalorder %s30, %s31
      %p42 = scmp.eq.s32.totalorder %s22, 0
      %p43 = por %p41, %p42
      %p44 = scmp.ne.s32.totalorder %s30, %s31
      %p45 = scmp.eq.s32.totalorder %s23, 1
      %p46 = por %p44, %p45
      %p48 = scmp.ne.s32.totalorder %s31, %s47
      %p49 = scmp.eq.s32.totalorder %s23, 0
      %p50 = por %p48, %p49
      %s52 = sadd.s32 %s51, 1
      %p55 = scmp.eq.s32.totalorder %s17, 1
      %p56 = scmp.ne.s32.totalorder %s51, %s53
      %p57 = scmp.eq.s32.totalorder %s17, 0
      %p58 = por %p56, %p57
      %p59 = scmp.ne.s32.totalorder %s51, %s53
      %p60 = scmp.eq.s32.totalorder %s22, 1
      %p61 = por %p59, %p60
      %p62 = scmp.ne.s32.totalorder %s53, %s54
      %p63 = scmp.eq.s32.totalorder %s22, 0
      %p64 = por %p62, %p63
      %p65 = scmp.ne.s32.totalorder %s53, %s54
      %p66 = scmp.eq.s32.totalorder %s23, 1
      %p67 = por %p65, %p66
      %p69 = scmp.ne.s32.totalorder %s54, %s68
      %p70 = scmp.eq.s32.totalorder %s23, 0
      %p71 = por %p69, %p70
      %s73 = sadd.s32 %s72, 1
      %p76 = scmp.eq.s32.totalorder %s17, 1
      %p77 = scmp.ne.s32.totalorder %s72, %s74
      %p78 = scmp.eq.s32.totalorder %s17, 0
      %p79 = por %p77, %p78
      %p80 = scmp.ne.s32.totalorder %s72, %s74
      %p81 = scmp.eq.s32.totalorder %s22, 1
      %p82 = por %p80, %p81
      %p83 = scmp.ne.s32.totalorder %s74, %s75
      %p84 = scmp.eq.s32.totalorder %s22, 0
      %p85 = por %p83, %p84
      %p86 = scmp.ne.s32.totalorder %s74, %s75
      %p87 = scmp.eq.s32.totalorder %s23, 1
      %p88 = por %p86, %p87
      %p90 = scmp.ne.s32.totalorder %s75, %s89
      %p91 = scmp.eq.s32.totalorder %s23, 0
      %p92 = por %p90, %p91
      %s94 = sadd.s32 %s93, 1
      %p97 = scmp.eq.s32.totalorder %s17, 1
      %p98 = scmp.ne.s32.totalorder %s93, %s95
      %p99 = scmp.eq.s32.totalorder %s17, 0
      %p100 = por %p98, %p99
      %p101 = scmp.ne.s32.totalorder %s93, %s95
      %p102 = scmp.eq.s32.totalorder %s22, 1
      %p103 = por %p101, %p102
      %p104 = scmp.ne.s32.totalorder %s95, %s96
      %p105 = scmp.eq.s32.totalorder %s22, 0
      %p106 = por %p104, %p105
      %p107 = scmp.ne.s32.totalorder %s95, %s96
      %p108 = scmp.eq.s32.totalorder %s23, 1
      %p109 = por %p107, %p108
      %p111 = scmp.ne.s32.totalorder %s96, %s110
      %p112 = scmp.eq.s32.totalorder %s23, 0
      %p113 = por %p111, %p112
      %s115 = sadd.s32 %s114, 1
      %p118 = scmp.eq.s32.totalorder %s17, 1
      %p119 = scmp.ne.s32.totalorder %s114, %s116
      %p120 = scmp.eq.s32.totalorder %s17, 0
      %p121 = por %p119, %p120
      %p122 = scmp.ne.s32.totalorder %s114, %s116
      %p123 = scmp.eq.s32.totalorder %s22, 1
      %p124 = por %p122, %p123
      %p125 = scmp.ne.s32.totalorder %s116, %s117
      %p126 = scmp.eq.s32.totalorder %s22, 0
      %p127 = por %p125, %p126
      %p128 = scmp.ne.s32.totalorder %s116, %s117
      %p129 = scmp.eq.s32.totalorder %s23, 1
      %p130 = por %p128, %p129
      %p132 = scmp.ne.s32.totalorder %s117, %s131
      %p133 = scmp.eq.s32.totalorder %s23, 0
      %p134 = por %p132, %p133
      %s136 = sadd.s32 %s135, 1
      %p139 = scmp.eq.s32.totalorder %s17, 1
      %p140 = scmp.ne.s32.totalorder %s135, %s137
      %p141 = scmp.eq.s32.totalorder %s17, 0
      %p142 = por %p140, %p141
      %p143 = scmp.ne.s32.totalorder %s135, %s137
      %p144 = scmp.eq.s32.totalorder %s22, 1
      %p145 = por %p143, %p144
      %p146 = scmp.ne.s32.totalorder %s137, %s138
      %p147 = scmp.eq.s32.totalorder %s22, 0
      %p148 = por %p146, %p147
      %p149 = scmp.ne.s32.totalorder %s137, %s138
      %p150 = scmp.eq.s32.totalorder %s23, 1
      %p151 = por %p149, %p150
      %p153 = scmp.ne.s32.totalorder %s138, %s152
      %p154 = scmp.eq.s32.totalorder %s23, 0
      %p155 = por %p153, %p154
      %s157 = sadd.s32 %s156, 1
      %p160 = scmp.eq.s32.totalorder %s17, 1
      %p161 = scmp.ne.s32.totalorder %s156, %s158
      %p162 = scmp.eq.s32.totalorder %s17, 0
      %p163 = por %p161, %p162
      %p164 = scmp.ne.s32.totalorder %s156, %s158
      %p165 = scmp.eq.s32.totalorder %s22, 1
      %p166 = por %p164, %p165
      %p167 = scmp.ne.s32.totalorder %s158, %s159
      %p168 = scmp.eq.s32.totalorder %s22, 0
      %p169 = por %p167, %p168
      %p170 = scmp.ne.s32.totalorder %s158, %s159
      %p171 = scmp.eq.s32.totalorder %s23, 1
      %p172 = por %p170, %p171
      %p174 = scmp.ne.s32.totalorder %s159, %s173
      %p175 = scmp.eq.s32.totalorder %s23, 0
      %p176 = por %p174, %p175
      %s177 = ssub.s32 %s17, %s24
      %p178 = scmp.eq.s32.totalorder %s177, 0
      %s180 = sadd.s32 %s179, 1
      %s181 = scalar_select %p178, %s179, %s180
      %p184 = pneg %p178
      %p185 = scmp.eq.s32.totalorder %s17, 1
      %p186 = por %p184, %p185
      %p187 = scmp.ne.s32.totalorder %s179, %s182
      %p188 = scmp.eq.s32.totalorder %s17, 0
      %p189 = por %p187, %p188
      %p190 = scmp.ne.s32.totalorder %s179, %s182
      %p191 = scmp.eq.s32.totalorder %s22, 1
      %p192 = por %p190, %p191
      %p193 = scmp.ne.s32.totalorder %s182, %s183
      %p194 = scmp.eq.s32.totalorder %s22, 0
      %p195 = por %p193, %p194
      %p196 = scmp.ne.s32.totalorder %s182, %s183
      %p197 = scmp.eq.s32.totalorder %s23, 1
      %p198 = por %p196, %p197
      %p200 = scmp.ne.s32.totalorder %s183, %s199
      %p201 = scmp.eq.s32.totalorder %s23, 0
      %p202 = por %p200, %p201
      %p203 = scmp.le.s32.totalorder 1, %s17
      %p204 = scmp.lt.s32.totalorder %s17, 3
      %p205 = pnand %p203, %p204
      %p206 = pneg %p205
      // Predicated region
      $region9: #{tpu_custom_call.1} parent=5 // pred_check
        _
      $region10: #{tpu_custom_call.1} parent=5 // pred_check_branch
        %208 = sbr.rel (%p205) target = $region12
      $region11: #{tpu_custom_call.1} parent=5 // pred_region
        %s209 = ssub.s32 %s17, 1
        // Predicated region
        $region13: #{tpu_custom_call.1} parent=11 // pred_check
          %p210 = pneg %p64
        $region14: #{tpu_custom_call.1} parent=11 // pred_check_branch
          %212 = sbr.rel (%p210) target = $region16
        $region15: #{tpu_custom_call.1} parent=11 // pred_region
          _
        $region16: #{tpu_custom_call.1} parent=11 // pred_fallthru
          _
        // Predicated region
        $region17: #{tpu_custom_call.1} parent=11 // pred_check
          %p213 = pneg %p85
        $region18: #{tpu_custom_call.1} parent=11 // pred_check_branch
          %215 = sbr.rel (%p213) target = $region20
        $region19: #{tpu_custom_call.1} parent=11 // pred_region
          _
        $region20: #{tpu_custom_call.1} parent=11 // pred_fallthru
          _
        // Predicated region
        $region21: #{tpu_custom_call.1} parent=11 // pred_check
          %p216 = pneg %p106
        $region22: #{tpu_custom_call.1} parent=11 // pred_check_branch
          %218 = sbr.rel (%p216) target = $region24
        $region23: #{tpu_custom_call.1} parent=11 // pred_region
          %220 = vsyncadd [#allocation5], 0
          %s221 = sshll.u32 %s3, 4
          %s222 = int_to_ptr.hbm [resolvable:$true] %s221
          %s223 = sshll.u32 [#allocation4], 4
          %s224 = int_to_ptr.vmem [resolvable:$true] %s223
          %229 = dma.hbm_to_vmem [thread:$0]  %s222, 256, %s224, [#allocation5], 64, 64, 4
        $region24: #{tpu_custom_call.1} parent=11 // pred_fallthru
          _
        // Predicated region
        $region25: #{tpu_custom_call.1} parent=11 // pred_check
          %p230 = pneg %p127
        $region26: #{tpu_custom_call.1} parent=11 // pred_check_branch
          %232 = sbr.rel (%p230) target = $region28
        $region27: #{tpu_custom_call.1} parent=11 // pred_region
          _
        $region28: #{tpu_custom_call.1} parent=11 // pred_fallthru
          _
        // Predicated region
        $region29: #{tpu_custom_call.1} parent=11 // pred_check
          %p233 = pneg %p148
        $region30: #{tpu_custom_call.1} parent=11 // pred_check_branch
          %235 = sbr.rel (%p233) target = $region32
        $region31: #{tpu_custom_call.1} parent=11 // pred_region
          _
        $region32: #{tpu_custom_call.1} parent=11 // pred_fallthru
          _
        // Predicated region
        $region33: #{tpu_custom_call.1} parent=11 // pred_check
          %p236 = pneg %p169
        $region34: #{tpu_custom_call.1} parent=11 // pred_check_branch
          %238 = sbr.rel (%p236) target = $region36
        $region35: #{tpu_custom_call.1} parent=11 // pred_region
          _
        $region36: #{tpu_custom_call.1} parent=11 // pred_fallthru
          _
      $region12: #{tpu_custom_call.1} parent=5 // pred_fallthru
        _
      %p239 = scmp.lt.s32.totalorder %s17, 2
      // Predicated region
      $region37: #{tpu_custom_call.1} parent=5 // pred_check
        %p240 = pneg %p239
      $region38: #{tpu_custom_call.1} parent=5 // pred_check_branch
        %242 = sbr.rel (%p240) target = $region40
      $region39: #{tpu_custom_call.1} parent=5 // pred_region
        // Predicated region
        $region41: #{tpu_custom_call.1} parent=39 // pred_check
          %p243 = pneg %p37
        $region42: #{tpu_custom_call.1} parent=39 // pred_check_branch
          %245 = sbr.rel (%p243) target = $region44
        $region43: #{tpu_custom_call.1} parent=39 // pred_region
          %s246 = sand.u32 %s27, 1
          %s247 = scalar_lea.sflag [#allocation3], %s246
          %s248 = sand.u32 %s27, 1
          %s249 = smul.addr %s248, 16
          %s250 = scalar_lea.vmem [#allocation2], %s249
          %s251 = smul.u32 2, %s17
          %253 = vsyncadd %s247, 0
          %s254 = smul.addr %s251, 8
          %s255 = scalar_lea.hbm %s0, %s254
          %s256 = sshll.u32 %s255, 4
          %s257 = int_to_ptr.hbm [resolvable:$true] %s256
          %s258 = sshll.u32 %s250, 4
          %s259 = int_to_ptr.vmem [resolvable:$true] %s258
          %264 = dma.hbm_to_vmem [thread:$0]  %s257, 256, %s259, %s247, 128, 128, 8
        $region44: #{tpu_custom_call.1} parent=39 // pred_fallthru
          _
      $region40: #{tpu_custom_call.1} parent=5 // pred_fallthru
        _
      %p265 = scmp.le.s32.totalorder 1, %s17
      %p266 = scmp.lt.s32.totalorder %s17, 3
      %p267 = pnand %p265, %p266
      %p268 = pneg %p267
      // Predicated region
      $region45: #{tpu_custom_call.1} parent=5 // pred_check
        _
      $region46: #{tpu_custom_call.1} parent=5 // pred_check_branch
        %270 = sbr.rel (%p267) target = $region48
      $region47: #{tpu_custom_call.1} parent=5 // pred_region
        %s271 = ssub.s32 %s17, 1
        %s272 = sand.u32 %s30, 1
        %s273 = scalar_lea.sflag [#allocation3], %s272
        %s274 = sand.u32 %s30, 1
        %s275 = smul.addr %s274, 16
        %s276 = scalar_lea.vmem [#allocation2], %s275
        // Predicated region
        $region49: #{tpu_custom_call.1} parent=47 // pred_check
          %p277 = pneg %p43
        $region50: #{tpu_custom_call.1} parent=47 // pred_check_branch
          %279 = sbr.rel (%p277) target = $region52
        $region51: #{tpu_custom_call.1} parent=47 // pred_region
          %281 = dma.done %s273, 256
        $region52: #{tpu_custom_call.1} parent=47 // pred_fallthru
          _
        // Predicated region
        $region53: #{tpu_custom_call.1} parent=47 // pred_check
          %p282 = pneg %p106
        $region54: #{tpu_custom_call.1} parent=47 // pred_check_branch
          %284 = sbr.rel (%p282) target = $region56
        $region55: #{tpu_custom_call.1} parent=47 // pred_region
          %286 = dma.done [#allocation5], 256
        $region56: #{tpu_custom_call.1} parent=47 // pred_fallthru
          _
        %s287 = sand.u32 %s30, 1
        %s288 = scalar_lea.sflag [#allocation3], %s287
        %s289 = sand.u32 %s30, 1
        %s290 = smul.addr %s289, 16
        %s291 = scalar_lea.vmem [#allocation2], %s290
        %p292 = pneg %p43
        %p293 = pneg %p40
        %p294 = pneg %p64
        %p295 = pneg %p61
        %p296 = pneg %p85
        %p297 = pneg %p82
        %p298 = pneg %p106
        %p299 = pneg %p103
        %p300 = pneg %p127
        %p301 = pneg %p124
        %p302 = pneg %p148
        %p303 = pneg %p145
        %p304 = pneg %p169
        %p305 = pneg %p166
        %p306 = pneg %p195
        %p307 = pneg %p192
        %s308 = smul.u32 2, %s22
        %p309 = scmp.lt.s32.totalorder %s308, 3
        %s310 = scalar_select %p309, %s308, 3
        %s311 = smul.addr %s310, 8
        %s312 = scalar_lea.vmem %s7, %s311
        %s313 = smul.u32 2, %s22
        %s314 = smul.u32 2, %s22
        %p315 = scmp.lt.s32.totalorder %s314, 3
        %s316 = scalar_select %p315, %s314, 3
        %s317 = smul.addr %s316, 8
        %s318 = scalar_lea.vmem %s7, %s317
        %s319 = smul.u32 2, %s22
        %v321 = vld [vmem:[%s276] sm:$0xff]
        %v322 = vld [vmem:[%s276 + $0x8] sm:$0xff]
        %v323 = vpack.c.bf16 %v322, %v321
        %v324 = vld [vmem:[%s1] sm:$0xf]
        %v325 = vld [vmem:[%s1 + $0x4] sm:$0xf]
        %v326 = vld [vmem:[%s1 + $0x8] sm:$0xf]
        %v327 = vld [vmem:[%s1 + $0xc] sm:$0xf]
        %v328 = vld [vmem:[%s2] sm:$0x1]
        %v330 = vperm.slane %v328, 0
        %v336 = vunpack.c.l.b16 %v324
        %v337 = vunpack.c.l.b16 %v325
        %v338 = vunpack.c.l.b16 %v326
        %v339 = vunpack.c.l.b16 %v327
        %v340 = vpack.c.b16 %v337, %v336
        %v341 = vpack.c.b16 %v339, %v338
        %vm344 = vcmask 261120
        %v346 = vsel %vm344, %v323, 0
        %348 = vmatpush.bf16.msra.mxu0 0
        %349 = vmatpush.bf16.msra.mxu0 0
        %350 = vmatpush.bf16.msra.mxu0 0
        %351 = vmatpush.bf16.msra.mxu0 0
        %352 = vmatpush.bf16.msra.mxu0 0
        %353 = vmatpush.bf16.msra.mxu0 0
        %354 = vmatpush.bf16.msra.mxu0 %v341
        %355 = vmatpush.bf16.msra.mxu0 %v340
        %356 = vmatmul.bf16.gmra.mxu0 %v346
        %v357 = vpop.f32.mrf.mxu0
        %v358 = vadd.f32 %v330, %v357
        %v359 = vpop.f32.mrf.mxu0
        %v360 = vadd.f32 %v330, %v359
        %361 = vdwg.mxu0
        %v362 = vmax.f32 %v358, 0.0
        %v363 = vmax.f32 %v360, 0.0
        %v364 = vpack.c.bf16 %v363, %v362
        %v365 = vld [vmem:[#allocation4] sm:$0xf]
        %v366 = vld [vmem:[#allocation4 + $0x4] sm:$0xf]
        %v367 = vld [vmem:[#allocation4 + $0x8] sm:$0xf]
        %v368 = vld [vmem:[#allocation4 + $0xc] sm:$0xf]
        %v369 = vld [vmem:[%s4] sm:$0x1]
        %v371 = vperm.slane %v369, 0
        %v377 = vunpack.c.l.b16 %v365
        %v378 = vunpack.c.l.b16 %v366
        %v379 = vunpack.c.l.b16 %v367
        %v380 = vunpack.c.l.b16 %v368
        %v381 = vpack.c.b16 %v378, %v377
        %v382 = vpack.c.b16 %v380, %v379
        %v386 = vsel %vm344, %v364, 0
        %388 = vmatpush.bf16.msra.mxu0 0
        %389 = vmatpush.bf16.msra.mxu0 0
        %390 = vmatpush.bf16.msra.mxu0 0
        %391 = vmatpush.bf16.msra.mxu0 0
        %392 = vmatpush.bf16.msra.mxu0 0
        %393 = vmatpush.bf16.msra.mxu0 0
        %394 = vmatpush.bf16.msra.mxu0 %v382
        %395 = vmatpush.bf16.msra.mxu0 %v381
        %396 = vmatmul.bf16.gmra.mxu0 %v386
        %v397 = vpop.f32.mrf.mxu0
        %v398 = vadd.f32 %v371, %v397
        %v399 = vpop.f32.mrf.mxu0
        %v400 = vadd.f32 %v371, %v399
        %401 = vdwg.mxu0
        %v402 = vmax.f32 %v398, 0.0
        %v403 = vmax.f32 %v400, 0.0
        %v404 = vpack.c.bf16 %v403, %v402
        %v405 = vld [vmem:[%s5] sm:$0xf]
        %v406 = vld [vmem:[%s5 + $0x4] sm:$0xf]
        %v407 = vld [vmem:[%s5 + $0x8] sm:$0xf]
        %v408 = vld [vmem:[%s5 + $0xc] sm:$0xf]
        %v409 = vld [vmem:[%s6] sm:$0x1]
        %v411 = vperm.slane %v409, 0
        %v417 = vunpack.c.l.b16 %v405
        %v418 = vunpack.c.l.b16 %v406
        %v419 = vunpack.c.l.b16 %v407
        %v420 = vunpack.c.l.b16 %v408
        %v421 = vpack.c.b16 %v418, %v417
        %v422 = vpack.c.b16 %v420, %v419
        %v426 = vsel %vm344, %v404, 0
        %428 = vmatpush.bf16.msra.mxu0 0
        %429 = vmatpush.bf16.msra.mxu0 0
        %430 = vmatpush.bf16.msra.mxu0 0
        %431 = vmatpush.bf16.msra.mxu0 0
        %432 = vmatpush.bf16.msra.mxu0 0
        %433 = vmatpush.bf16.msra.mxu0 0
        %434 = vmatpush.bf16.msra.mxu0 %v422
        %435 = vmatpush.bf16.msra.mxu0 %v421
        %436 = vmatmul.bf16.gmra.mxu0 %v426
        %v437 = vpop.f32.mrf.mxu0
        %v438 = vadd.f32 %v411, %v437
        %v439 = vpop.f32.mrf.mxu0
        %v440 = vadd.f32 %v411, %v439
        %441 = vdwg.mxu0
        %vm442 = vcmask 64512
        %443 = vst.msk [vmem:[%s318] sm:$0xff] %vm442, %v438
        %444 = vst.msk [vmem:[%s318 + $0x8] sm:$0xff] %vm442, %v440
        %s445 = smul.u32 2, %s22
        %p446 = scmp.lt.s32.totalorder %s445, 3
        %s447 = scalar_select %p446, %s445, 3
        %s448 = smul.addr %s447, 8
        %s449 = scalar_lea.vmem %s7, %s448
        // Predicated region
        $region57: #{tpu_custom_call.1} parent=47 // pred_check
          %p450 = pneg %p192
        $region58: #{tpu_custom_call.1} parent=47 // pred_check_branch
          %452 = sbr.rel (%p450) target = $region60
        $region59: #{tpu_custom_call.1} parent=47 // pred_region
          %s453 = smul.u32 2, %s22
        $region60: #{tpu_custom_call.1} parent=47 // pred_fallthru
          _
      $region48: #{tpu_custom_call.1} parent=5 // pred_fallthru
        _
      %p454 = scmp.le.s32.totalorder 2, %s17
      // Predicated region
      $region61: #{tpu_custom_call.1} parent=5 // pred_check
        %p455 = pneg %p454
      $region62: #{tpu_custom_call.1} parent=5 // pred_check_branch
        %457 = sbr.rel (%p455) target = $region64
      $region63: #{tpu_custom_call.1} parent=5 // pred_region
        %s458 = ssub.s32 %s17, 2
        // Predicated region
        $region65: #{tpu_custom_call.1} parent=63 // pred_check
          %p459 = pneg %p198
        $region66: #{tpu_custom_call.1} parent=63 // pred_check_branch
          %461 = sbr.rel (%p459) target = $region68
        $region67: #{tpu_custom_call.1} parent=63 // pred_region
          %s462 = smul.u32 2, %s23
          %p463 = scmp.lt.s32.totalorder %s462, 3
          %s464 = scalar_select %p463, %s462, 3
          %s465 = smul.addr %s464, 8
          %s466 = scalar_lea.vmem %s7, %s465
        $region68: #{tpu_custom_call.1} parent=63 // pred_fallthru
          _
      $region64: #{tpu_custom_call.1} parent=5 // pred_fallthru
        _
    $region6: #{tpu_custom_call.1} parent=1 // loop_footer
      %s21 = sadd.s32 1, %s17
    $region7: #{tpu_custom_call.1} parent=1 // loop_footer_branch
      %16 = sbr.rel target = $region3
    $region8: #{tpu_custom_call.1} parent=1 // loop_exit
      _
    %467 = vsyncpa [#allocation3], 1
    %s468 = scalar_lea.sflag [#allocation3], 1
    %469 = vsyncpa %s468, 1
    %470 = vsyncpa [#allocation5], 1

</llo_original>
